<compile_context>
chip_gen: v5e
topology: v5e:2x2
jax: 0.10.0
libtpu: 0.0.40
codegen_flags: <defaults>
</compile_context>

<pallas_src>
import functools

import jax
import jax.numpy as jnp
from jax.experimental import pallas as pl
from jax.experimental.pallas import tpu as pltpu

LANE = 128
SUBLANE = 8


def _round_up(x, m):
    return (x + m - 1) // m * m


def _vae_forward_kernel(
    x_ref,        # (TM, Dp)     bf16 input tile
    eps_ref,      # (TM, Lp)     bf16 noise tile
    we_ref,       # (Dp, Ep)     bf16 encoder weight (pre-transposed, padded)
    be_ref,       # (1, Ep)      f32
    wms_ref,      # (Ep, 2*Lp)   bf16 fused mu|sigma head weight
    bms_ref,      # (1, 2*Lp)    f32
    wd1_ref,      # (Lp, Ep)     bf16 decoder hidden weight
    bd1_ref,      # (1, Ep)      f32
    wd2_ref,      # (Ep, Dp)     bf16 decoder output weight
    bd2_ref,      # (1, Dp)      f32
    recon_ref,    # (TM, Dp)     f32 output: reconstruction
    mu_ref,       # (TM, Lp)     f32 output: last_mu
    sigma_ref,    # (TM, Lp)     f32 output: last_sigma
    *, lp,
):
    # --- encoder MLP: Linear + ReLU (MXU bf16, f32 accumulate/elementwise) ---
    h = jnp.dot(x_ref[...], we_ref[...], preferred_element_type=jnp.float32)
    h = jnp.maximum(h + be_ref[...], 0.0)

    # --- fused variational heads: one (Ep, 2*Lp) matmul, slice mu | sigma ---
    ms = jnp.dot(h.astype(jnp.bfloat16), wms_ref[...],
                 preferred_element_type=jnp.float32) + bms_ref[...]
    mu = ms[:, :lp]
    sigma = jnp.exp(ms[:, lp:])

    # --- reparameterization: z = mu + sigma * eps (f32 VPU math) ---
    z = mu + sigma * eps_ref[...].astype(jnp.float32)

    # --- decoder MLP: Linear + ReLU + Linear ---
    d = jnp.dot(z.astype(jnp.bfloat16), wd1_ref[...],
                preferred_element_type=jnp.float32)
    d = jnp.maximum(d + bd1_ref[...], 0.0)
    recon = jnp.dot(d.astype(jnp.bfloat16), wd2_ref[...],
                    preferred_element_type=jnp.float32) + bd2_ref[...]

    recon_ref[...] = recon
    mu_ref[...] = mu
    sigma_ref[...] = sigma


def prepare_params(params):
    """One-time layout prep: transpose to (in, out), zero-pad feature dims to
    multiples of 128, fuse mu|sigma heads, cast MXU operands to bf16."""
    e_dim, d_in = params["we"].shape          # PyTorch layout (out, in)
    l_dim = params["wmu"].shape[0]
    dp = _round_up(d_in, LANE)
    ep = _round_up(e_dim, LANE)
    lp = _round_up(l_dim, LANE)

    def pad_w(w_t, rows, cols):  # w_t is (in, out)
        out = jnp.zeros((rows, cols), jnp.float32)
        return out.at[: w_t.shape[0], : w_t.shape[1]].set(w_t)

    def pad_b(b, cols):
        out = jnp.zeros((1, cols), jnp.float32)
        return out.at[0, : b.shape[0]].set(b)

    we = pad_w(params["we"].T, dp, ep).astype(jnp.bfloat16)
    be = pad_b(params["be"], ep)

    # fused mu|sigma head: columns [0:Lp) -> mu, [Lp:2Lp) -> sigma logits
    wms = jnp.zeros((ep, 2 * lp), jnp.float32)
    wms = wms.at[:e_dim, :l_dim].set(params["wmu"].T)
    wms = wms.at[:e_dim, lp:lp + l_dim].set(params["wsig"].T)
    wms = wms.astype(jnp.bfloat16)
    bms = jnp.zeros((1, 2 * lp), jnp.float32)
    bms = bms.at[0, :l_dim].set(params["bmu"])
    bms = bms.at[0, lp:lp + l_dim].set(params["bsig"])

    wd1 = pad_w(params["wd1"].T, lp, ep).astype(jnp.bfloat16)
    bd1 = pad_b(params["bd1"], ep)
    wd2 = pad_w(params["wd2"].T, ep, dp).astype(jnp.bfloat16)
    bd2 = pad_b(params["bd2"], dp)

    return dict(we=we, be=be, wms=wms, bms=bms,
                wd1=wd1, bd1=bd1, wd2=wd2, bd2=bd2)


@functools.partial(jax.jit, static_argnames=("tm",))
def vae_forward(x, prepared, eps, *, tm=128):
    """Fused VAE forward. Returns (recon, mu, sigma) in original (unpadded) shapes."""
    n, d_in = x.shape
    l = eps.shape[1]
    dp = prepared["wd2"].shape[1]
    lp = prepared["wd1"].shape[0]

    tm = min(tm, _round_up(n, SUBLANE))
    n_pad = _round_up(n, tm)

    # Pad batch to a tile multiple and features to lane width; MXU operands in bf16.
    x_p = jnp.zeros((n_pad, dp), jnp.bfloat16).at[:n, :d_in].set(
        x.astype(jnp.bfloat16))
    eps_p = jnp.zeros((n_pad, lp), jnp.bfloat16).at[:n, :l].set(
        eps.astype(jnp.bfloat16))

    grid = (n_pad // tm,)

    def batch_spec(shape):
        return pl.BlockSpec(shape, lambda i: (i, 0))

    def const_spec(arr):
        return pl.BlockSpec(arr.shape, lambda i: (0, 0))

    recon_p, mu_p, sigma_p = pl.pallas_call(
        functools.partial(_vae_forward_kernel, lp=lp),
        out_shape=(
            jax.ShapeDtypeStruct((n_pad, dp), jnp.float32),   # recon (padded)
            jax.ShapeDtypeStruct((n_pad, lp), jnp.float32),   # mu    (padded)
            jax.ShapeDtypeStruct((n_pad, lp), jnp.float32),   # sigma (padded)
        ),
        grid=grid,
        in_specs=[
            batch_spec((tm, dp)),            # x
            batch_spec((tm, lp)),            # eps
            const_spec(prepared["we"]),      # weights stay VMEM-resident
            const_spec(prepared["be"]),
            const_spec(prepared["wms"]),
            const_spec(prepared["bms"]),
            const_spec(prepared["wd1"]),
            const_spec(prepared["bd1"]),
            const_spec(prepared["wd2"]),
            const_spec(prepared["bd2"]),
        ],
        out_specs=(
            batch_spec((tm, dp)),
            batch_spec((tm, lp)),
            batch_spec((tm, lp)),
        ),
        compiler_params=pltpu.CompilerParams(
            dimension_semantics=("parallel",)),
    )(x_p, eps_p,
      prepared["we"], prepared["be"], prepared["wms"], prepared["bms"],
      prepared["wd1"], prepared["bd1"], prepared["wd2"], prepared["bd2"])

    return recon_p[:n, :d_in], mu_p[:n, :l], sigma_p[:n, :l]


def init_params(key, d_in, encoder_dims, latent_dims):
    """Deterministic parameter init (PyTorch nn.Linear weight shape = (out, in))."""
    ks = jax.random.split(key, 10)

    def lin(kw, kb, out_dim, in_dim):
        bound = 1.0 / jnp.sqrt(in_dim)
        w = jax.random.uniform(kw, (out_dim, in_dim), jnp.float32, -bound, bound)
        b = jax.random.uniform(kb, (out_dim,), jnp.float32, -bound, bound)
        return w, b

    we, be = lin(ks[0], ks[1], encoder_dims, d_in)            # encoder Linear
    wmu, bmu = lin(ks[2], ks[3], latent_dims, encoder_dims)   # linear_mu
    wsig, bsig = lin(ks[4], ks[5], latent_dims, encoder_dims) # linear_sigma
    wd1, bd1 = lin(ks[6], ks[7], encoder_dims, latent_dims)   # decoder Linear 1
    wd2, bd2 = lin(ks[8], ks[9], d_in, encoder_dims)          # decoder Linear 2

    return dict(we=we, be=be, wmu=wmu, bmu=bmu, wsig=wsig, bsig=bsig,
                wd1=wd1, bd1=bd1, wd2=wd2, bd2=bd2)


def vae_forward_ref(x, params, eps):
    """Pure-JAX reference with the same bf16-operand / f32-accumulate math."""
    def mm(a, w_t):
        return jnp.dot(a.astype(jnp.bfloat16), w_t.astype(jnp.bfloat16),
                       preferred_element_type=jnp.float32)

    eps32 = eps.astype(jnp.bfloat16).astype(jnp.float32)
    h = jnp.maximum(mm(x, params["we"].T) + params["be"], 0.0)
    mu = mm(h, params["wmu"].T) + params["bmu"]
    sigma = jnp.exp(mm(h, params["wsig"].T) + params["bsig"])
    z = mu + sigma * eps32
    d = jnp.maximum(mm(z, params["wd1"].T) + params["bd1"], 0.0)
    recon = mm(d, params["wd2"].T) + params["bd2"]
    return recon, mu, sigma


if __name__ == "__main__":
    # Small MLP VAE: batch=512 (4 grid tiles of 128), input=64, enc=32, latent=16.
    N, D_IN, ENC_DIMS, LAT_DIMS = 512, 64, 32, 16

    key = jax.random.PRNGKey(0)
    k_x, k_p, k_eps = jax.random.split(key, 3)

    x = jax.random.normal(k_x, (N, D_IN), jnp.float32)
    params = init_params(k_p, D_IN, ENC_DIMS, LAT_DIMS)
    # Deterministic stand-in for torch.distributions.Normal(0, 1).sample(mu.shape)
    eps = jax.random.normal(k_eps, (N, LAT_DIMS), jnp.float32)

    prepared = prepare_params(params)   # one-time layout / padding / bf16 cast

    recon, mu, sigma = vae_forward(x, prepared, eps)
    jax.block_until_ready((recon, mu, sigma))

    # Correctness check against pure-JAX reference with matching precision.
    recon_r, mu_r, sigma_r = vae_forward_ref(x, params, eps)
    assert recon.shape == x.shape
    assert mu.shape == (N, LAT_DIMS) and sigma.shape == (N, LAT_DIMS)
    assert jnp.allclose(recon, recon_r, atol=2e-2, rtol=2e-2)
    assert jnp.allclose(mu, mu_r, atol=2e-2, rtol=2e-2)
    assert jnp.allclose(sigma, sigma_r, atol=2e-2, rtol=2e-2)

    print("KERNEL_OK")
</pallas_src>

<mosaic_0001>
module attributes {stable_mosaic.version = 11 : i64} {
  func.func @_vae_forward_kernel(%arg0: i32, %arg1: memref<128x128xbf16, #tpu.memory_space<vmem>>, %arg2: memref<128x128xbf16, #tpu.memory_space<vmem>>, %arg3: memref<128x128xbf16, #tpu.memory_space<vmem>>, %arg4: memref<1x128xf32, #tpu.memory_space<vmem>>, %arg5: memref<128x256xbf16, #tpu.memory_space<vmem>>, %arg6: memref<1x256xf32, #tpu.memory_space<vmem>>, %arg7: memref<128x128xbf16, #tpu.memory_space<vmem>>, %arg8: memref<1x128xf32, #tpu.memory_space<vmem>>, %arg9: memref<128x128xbf16, #tpu.memory_space<vmem>>, %arg10: memref<1x128xf32, #tpu.memory_space<vmem>>, %arg11: memref<128x128xf32, #tpu.memory_space<vmem>>, %arg12: memref<128x128xf32, #tpu.memory_space<vmem>>, %arg13: memref<128x128xf32, #tpu.memory_space<vmem>>) attributes {dimension_semantics = [#tpu.dimension_semantics<parallel>], iteration_bounds = array<i64: 4>, scalar_prefetch = 0 : i64, scratch_operands = 0 : i64, tpu.core_type = #tpu.core_type<tc>, window_params = [{transform_indices = @transform_0, window_bounds = array<i64: 128, 128>}, {transform_indices = @transform_1, window_bounds = array<i64: 128, 128>}, {pipeline_mode = #tpu.pipeline_mode<synchronous>, transform_indices = @transform_2, window_bounds = array<i64: 128, 128>}, {pipeline_mode = #tpu.pipeline_mode<synchronous>, transform_indices = @transform_3, window_bounds = array<i64: 1, 128>}, {pipeline_mode = #tpu.pipeline_mode<synchronous>, transform_indices = @transform_4, window_bounds = array<i64: 128, 256>}, {pipeline_mode = #tpu.pipeline_mode<synchronous>, transform_indices = @transform_5, window_bounds = array<i64: 1, 256>}, {pipeline_mode = #tpu.pipeline_mode<synchronous>, transform_indices = @transform_6, window_bounds = array<i64: 128, 128>}, {pipeline_mode = #tpu.pipeline_mode<synchronous>, transform_indices = @transform_7, window_bounds = array<i64: 1, 128>}, {pipeline_mode = #tpu.pipeline_mode<synchronous>, transform_indices = @transform_8, window_bounds = array<i64: 128, 128>}, {pipeline_mode = #tpu.pipeline_mode<synchronous>, transform_indices = @transform_9, window_bounds = array<i64: 1, 128>}, {transform_indices = @transform_10, window_bounds = array<i64: 128, 128>}, {transform_indices = @transform_11, window_bounds = array<i64: 128, 128>}, {transform_indices = @transform_12, window_bounds = array<i64: 128, 128>}]} {
    %c0 = arith.constant 0 : index
    %c0_0 = arith.constant 0 : index
    %0 = vector.load %arg1[%c0, %c0_0] : memref<128x128xbf16, #tpu.memory_space<vmem>>, vector<128x128xbf16>
    %c0_1 = arith.constant 0 : index
    %c0_2 = arith.constant 0 : index
    %1 = vector.load %arg3[%c0_1, %c0_2] : memref<128x128xbf16, #tpu.memory_space<vmem>>, vector<128x128xbf16>
    %cst = arith.constant dense<0.000000e+00> : vector<128x128xf32>
    %2 = tpu.matmul %0, %1, %cst {dimension_numbers = #tpu.dot_dimension_numbers<[1], [0], [0], [1], [0, 0, 1, 1], [], []>} : vector<128x128xbf16>, vector<128x128xbf16>, vector<128x128xf32> -> vector<128x128xf32>
    %c0_3 = arith.constant 0 : index
    %c0_4 = arith.constant 0 : index
    %3 = vector.load %arg4[%c0_3, %c0_4] : memref<1x128xf32, #tpu.memory_space<vmem>>, vector<1x128xf32>
    %4 = vector.broadcast %3 : vector<1x128xf32> to vector<128x128xf32>
    %5 = arith.addf %2, %4 : vector<128x128xf32>
    %cst_5 = arith.constant 0.000000e+00 : f32
    %6 = vector.broadcast %cst_5 : f32 to vector<128x128xf32>
    %7 = arith.maximumf %5, %6 : vector<128x128xf32>
    %8 = arith.truncf %7 : vector<128x128xf32> to vector<128x128xbf16>
    %c0_6 = arith.constant 0 : index
    %c0_7 = arith.constant 0 : index
    %9 = vector.load %arg5[%c0_6, %c0_7] : memref<128x256xbf16, #tpu.memory_space<vmem>>, vector<128x256xbf16>
    %cst_8 = arith.constant dense<0.000000e+00> : vector<128x256xf32>
    %10 = tpu.matmul %8, %9, %cst_8 {dimension_numbers = #tpu.dot_dimension_numbers<[1], [0], [0], [1], [0, 0, 1, 1], [], []>} : vector<128x128xbf16>, vector<128x256xbf16>, vector<128x256xf32> -> vector<128x256xf32>
    %c0_9 = arith.constant 0 : index
    %c0_10 = arith.constant 0 : index
    %11 = vector.load %arg6[%c0_9, %c0_10] : memref<1x256xf32, #tpu.memory_space<vmem>>, vector<1x256xf32>
    %12 = vector.broadcast %11 : vector<1x256xf32> to vector<128x256xf32>
    %13 = arith.addf %10, %12 : vector<128x256xf32>
    %14 = vector.extract_strided_slice %13 {offsets = [0, 0], sizes = [128, 128], strides = [1, 1]} : vector<128x256xf32> to vector<128x128xf32>
    %15 = vector.extract_strided_slice %13 {offsets = [0, 128], sizes = [128, 128], strides = [1, 1]} : vector<128x256xf32> to vector<128x128xf32>
    %16 = math.exp %15 : vector<128x128xf32>
    %c0_11 = arith.constant 0 : index
    %c0_12 = arith.constant 0 : index
    %17 = vector.load %arg2[%c0_11, %c0_12] : memref<128x128xbf16, #tpu.memory_space<vmem>>, vector<128x128xbf16>
    %18 = arith.extf %17 : vector<128x128xbf16> to vector<128x128xf32>
    %19 = arith.mulf %16, %18 : vector<128x128xf32>
    %20 = arith.addf %14, %19 : vector<128x128xf32>
    %21 = arith.truncf %20 : vector<128x128xf32> to vector<128x128xbf16>
    %c0_13 = arith.constant 0 : index
    %c0_14 = arith.constant 0 : index
    %22 = vector.load %arg7[%c0_13, %c0_14] : memref<128x128xbf16, #tpu.memory_space<vmem>>, vector<128x128xbf16>
    %cst_15 = arith.constant dense<0.000000e+00> : vector<128x128xf32>
    %23 = tpu.matmul %21, %22, %cst_15 {dimension_numbers = #tpu.dot_dimension_numbers<[1], [0], [0], [1], [0, 0, 1, 1], [], []>} : vector<128x128xbf16>, vector<128x128xbf16>, vector<128x128xf32> -> vector<128x128xf32>
    %c0_16 = arith.constant 0 : index
    %c0_17 = arith.constant 0 : index
    %24 = vector.load %arg8[%c0_16, %c0_17] : memref<1x128xf32, #tpu.memory_space<vmem>>, vector<1x128xf32>
    %25 = vector.broadcast %24 : vector<1x128xf32> to vector<128x128xf32>
    %26 = arith.addf %23, %25 : vector<128x128xf32>
    %cst_18 = arith.constant 0.000000e+00 : f32
    %27 = vector.broadcast %cst_18 : f32 to vector<128x128xf32>
    %28 = arith.maximumf %26, %27 : vector<128x128xf32>
    %29 = arith.truncf %28 : vector<128x128xf32> to vector<128x128xbf16>
    %c0_19 = arith.constant 0 : index
    %c0_20 = arith.constant 0 : index
    %30 = vector.load %arg9[%c0_19, %c0_20] : memref<128x128xbf16, #tpu.memory_space<vmem>>, vector<128x128xbf16>
    %cst_21 = arith.constant dense<0.000000e+00> : vector<128x128xf32>
    %31 = tpu.matmul %29, %30, %cst_21 {dimension_numbers = #tpu.dot_dimension_numbers<[1], [0], [0], [1], [0, 0, 1, 1], [], []>} : vector<128x128xbf16>, vector<128x128xbf16>, vector<128x128xf32> -> vector<128x128xf32>
    %c0_22 = arith.constant 0 : index
    %c0_23 = arith.constant 0 : index
    %32 = vector.load %arg10[%c0_22, %c0_23] : memref<1x128xf32, #tpu.memory_space<vmem>>, vector<1x128xf32>
    %33 = vector.broadcast %32 : vector<1x128xf32> to vector<128x128xf32>
    %34 = arith.addf %31, %33 : vector<128x128xf32>
    %c0_24 = arith.constant 0 : index
    %c0_25 = arith.constant 0 : index
    %35 = vector.load %arg11[%c0_24, %c0_25] : memref<128x128xf32, #tpu.memory_space<vmem>>, vector<128x128xf32>
    tpu.vector_store %arg11[%c0_24, %c0_25], %34 {strides = array<i32>} : memref<128x128xf32, #tpu.memory_space<vmem>>, vector<128x128xf32>,
    %c0_26 = arith.constant 0 : index
    %c0_27 = arith.constant 0 : index
    %36 = vector.load %arg12[%c0_26, %c0_27] : memref<128x128xf32, #tpu.memory_space<vmem>>, vector<128x128xf32>
    tpu.vector_store %arg12[%c0_26, %c0_27], %14 {strides = array<i32>} : memref<128x128xf32, #tpu.memory_space<vmem>>, vector<128x128xf32>,
    %c0_28 = arith.constant 0 : index
    %c0_29 = arith.constant 0 : index
    %37 = vector.load %arg13[%c0_28, %c0_29] : memref<128x128xf32, #tpu.memory_space<vmem>>, vector<128x128xf32>
    tpu.vector_store %arg13[%c0_28, %c0_29], %16 {strides = array<i32>} : memref<128x128xf32, #tpu.memory_space<vmem>>, vector<128x128xf32>,
    return
  }
  func.func @transform_0(%arg0: i32) -> (i32, i32) {
    %c0_i32 = arith.constant 0 : i32
    %c0_i32_0 = arith.constant 0 : i32
    return %arg0, %c0_i32 : i32, i32
  }
  func.func @transform_1(%arg0: i32) -> (i32, i32) {
    %c0_i32 = arith.constant 0 : i32
    %c0_i32_0 = arith.constant 0 : i32
    return %arg0, %c0_i32 : i32, i32
  }
  func.func @transform_2(%arg0: i32) -> (i32, i32) {
    %c0_i32 = arith.constant 0 : i32
    %c0_i32_0 = arith.constant 0 : i32
    %c0_i32_1 = arith.constant 0 : i32
    return %c0_i32, %c0_i32_0 : i32, i32
  }
  func.func @transform_3(%arg0: i32) -> (i32, i32) {
    %c0_i32 = arith.constant 0 : i32
    %c0_i32_0 = arith.constant 0 : i32
    %c0_i32_1 = arith.constant 0 : i32
    return %c0_i32, %c0_i32_0 : i32, i32
  }
  func.func @transform_4(%arg0: i32) -> (i32, i32) {
    %c0_i32 = arith.constant 0 : i32
    %c0_i32_0 = arith.constant 0 : i32
    %c0_i32_1 = arith.constant 0 : i32
    return %c0_i32, %c0_i32_0 : i32, i32
  }
  func.func @transform_5(%arg0: i32) -> (i32, i32) {
    %c0_i32 = arith.constant 0 : i32
    %c0_i32_0 = arith.constant 0 : i32
    %c0_i32_1 = arith.constant 0 : i32
    return %c0_i32, %c0_i32_0 : i32, i32
  }
  func.func @transform_6(%arg0: i32) -> (i32, i32) {
    %c0_i32 = arith.constant 0 : i32
    %c0_i32_0 = arith.constant 0 : i32
    %c0_i32_1 = arith.constant 0 : i32
    return %c0_i32, %c0_i32_0 : i32, i32
  }
  func.func @transform_7(%arg0: i32) -> (i32, i32) {
    %c0_i32 = arith.constant 0 : i32
    %c0_i32_0 = arith.constant 0 : i32
    %c0_i32_1 = arith.constant 0 : i32
    return %c0_i32, %c0_i32_0 : i32, i32
  }
  func.func @transform_8(%arg0: i32) -> (i32, i32) {
    %c0_i32 = arith.constant 0 : i32
    %c0_i32_0 = arith.constant 0 : i32
    %c0_i32_1 = arith.constant 0 : i32
    return %c0_i32, %c0_i32_0 : i32, i32
  }
  func.func @transform_9(%arg0: i32) -> (i32, i32) {
    %c0_i32 = arith.constant 0 : i32
    %c0_i32_0 = arith.constant 0 : i32
    %c0_i32_1 = arith.constant 0 : i32
    return %c0_i32, %c0_i32_0 : i32, i32
  }
  func.func @transform_10(%arg0: i32) -> (i32, i32) {
    %c0_i32 = arith.constant 0 : i32
    %c0_i32_0 = arith.constant 0 : i32
    return %arg0, %c0_i32 : i32, i32
  }
  func.func @transform_11(%arg0: i32) -> (i32, i32) {
    %c0_i32 = arith.constant 0 : i32
    %c0_i32_0 = arith.constant 0 : i32
    return %arg0, %c0_i32 : i32, i32
  }
  func.func @transform_12(%arg0: i32) -> (i32, i32) {
    %c0_i32 = arith.constant 0 : i32
    %c0_i32_0 = arith.constant 0 : i32
    return %arg0, %c0_i32 : i32, i32
  }
}

</mosaic_0001>

<llo_original>
// kernel: vae_forward.1
$region0: #{vae_forward.1}
  #allocation0 [shape = 'u32[]', space=smem, size = 0x4, offset = 0x4, fixed_abs, tag = 'smem constant byte address 0x4 - core index']
  #allocation1 [shape = 'u32[72,128]{1,0:T(1,128)}', space=vmem, size = 0x9000, scoped, tag = 'internal scratch']
  %s0 = inlined_call_operand.vmem [shape: bf16[512,128], index: 0, kind: input, shape index: {}]
  %s1 = inlined_call_operand.vmem [shape: bf16[512,128], index: 1, kind: input, shape index: {}]
  %s2 = inlined_call_operand.vmem [shape: bf16[128,128], index: 2, kind: input, shape index: {}]
  %s3 = inlined_call_operand.vmem [shape: f32[1,128], index: 3, kind: input, shape index: {}]
  %s4 = inlined_call_operand.vmem [shape: bf16[128,256], index: 4, kind: input, shape index: {}]
  %s5 = inlined_call_operand.vmem [shape: f32[1,256], index: 5, kind: input, shape index: {}]
  %s6 = inlined_call_operand.vmem [shape: bf16[128,128], index: 6, kind: input, shape index: {}]
  %s7 = inlined_call_operand.vmem [shape: f32[1,128], index: 7, kind: input, shape index: {}]
  %s8 = inlined_call_operand.vmem [shape: bf16[128,128], index: 8, kind: input, shape index: {}]
  %s9 = inlined_call_operand.vmem [shape: f32[1,128], index: 9, kind: input, shape index: {}]
  %s10 = inlined_call_operand.vmem [shape: f32[512,128], index: 10, kind: output, shape index: {0}]
  %s11 = inlined_call_operand.vmem [shape: f32[512,128], index: 11, kind: output, shape index: {1}]
  %s12 = inlined_call_operand.vmem [shape: f32[512,128], index: 12, kind: output, shape index: {2}]
  %13 = xla_tuple %s10, %s11, %s12
  %s14 = sld [smem:[#allocation0]]
  $region89: #{vae_forward.1} parent=0
    _
  %s16 = ssub.s32 1, %s14
  %s17 = scalar_select 0, %s16, %s14
  loop: start=0, step=1, limit=6
  $region2: #{vae_forward.1} parent=0 // loop_pre_header
    _
  $region3: #{vae_forward.1} parent=0 // loop_header
    %s19 = sphi 0, %s23
    %p20 = scmp.ge.s32.totalorder %s19, 6
    %s29 = sphi 0, %s31
    %s32 = sphi 0, %s29
    %s33 = sphi 0, %s32
    %s49 = sphi 0, %s33
    %s55 = sphi 0, %s57
    %s58 = sphi 0, %s55
    %s59 = sphi 0, %s58
    %s75 = sphi 0, %s59
    %s79 = sphi 0, %s79
    %s81 = sphi 0, %s79
    %s82 = sphi 0, %s81
    %s96 = sphi 0, %s82
    %s100 = sphi 0, %s100
    %s102 = sphi 0, %s100
    %s103 = sphi 0, %s102
    %s117 = sphi 0, %s103
    %s121 = sphi 0, %s121
    %s123 = sphi 0, %s121
    %s124 = sphi 0, %s123
    %s138 = sphi 0, %s124
    %s142 = sphi 0, %s142
    %s144 = sphi 0, %s142
    %s145 = sphi 0, %s144
    %s159 = sphi 0, %s145
    %s163 = sphi 0, %s163
    %s165 = sphi 0, %s163
    %s166 = sphi 0, %s165
    %s180 = sphi 0, %s166
    %s184 = sphi 0, %s184
    %s186 = sphi 0, %s184
    %s187 = sphi 0, %s186
    %s201 = sphi 0, %s187
    %s205 = sphi 0, %s205
    %s207 = sphi 0, %s205
    %s208 = sphi 0, %s207
    %s222 = sphi 0, %s208
    %s226 = sphi 0, %s226
    %s228 = sphi 0, %s226
    %s229 = sphi 0, %s228
    %s243 = sphi 0, %s229
    %s249 = sphi 0, %s251
    %s252 = sphi 0, %s249
    %s253 = sphi 0, %s252
    %s269 = sphi 0, %s253
    %s275 = sphi 0, %s277
    %s278 = sphi 0, %s275
    %s279 = sphi 0, %s278
    %s295 = sphi 0, %s279
    %s301 = sphi 0, %s303
    %s304 = sphi 0, %s301
    %s305 = sphi 0, %s304
    %s321 = sphi 0, %s305
  $region4: #{vae_forward.1} parent=0 // loop_header_branch
    %22 = sbr.rel (%p20) target = $region8
  $region5: #{vae_forward.1} parent=0 // loop_body
    %s24 = ssub.s32 %s19, 1
    %s25 = ssub.s32 %s19, 2
    %s26 = sadd.s32 %s19, 1
    %s27 = ssub.s32 %s19, %s26
    %p28 = scmp.eq.s32.totalorder %s27, 0
    %s30 = sadd.s32 %s29, 1
    %s31 = scalar_select %p28, %s29, %s30
    %p34 = pneg %p28
    %p35 = scmp.eq.s32.totalorder %s19, 3
    %p36 = por %p34, %p35
    %p37 = scmp.ne.s32.totalorder %s29, %s32
    %p38 = scmp.eq.s32.totalorder %s19, 0
    %p39 = por %p37, %p38
    %p40 = scmp.ne.s32.totalorder %s29, %s32
    %p41 = scmp.eq.s32.totalorder %s24, 3
    %p42 = por %p40, %p41
    %p43 = scmp.ne.s32.totalorder %s32, %s33
    %p44 = scmp.eq.s32.totalorder %s24, 0
    %p45 = por %p43, %p44
    %p46 = scmp.ne.s32.totalorder %s32, %s33
    %p47 = scmp.eq.s32.totalorder %s25, 3
    %p48 = por %p46, %p47
    %p50 = scmp.ne.s32.totalorder %s33, %s49
    %p51 = scmp.eq.s32.totalorder %s25, 0
    %p52 = por %p50, %p51
    %s53 = ssub.s32 %s19, %s26
    %p54 = scmp.eq.s32.totalorder %s53, 0
    %s56 = sadd.s32 %s55, 1
    %s57 = scalar_select %p54, %s55, %s56
    %p60 = pneg %p54
    %p61 = scmp.eq.s32.totalorder %s19, 3
    %p62 = por %p60, %p61
    %p63 = scmp.ne.s32.totalorder %s55, %s58
    %p64 = scmp.eq.s32.totalorder %s19, 0
    %p65 = por %p63, %p64
    %p66 = scmp.ne.s32.totalorder %s55, %s58
    %p67 = scmp.eq.s32.totalorder %s24, 3
    %p68 = por %p66, %p67
    %p69 = scmp.ne.s32.totalorder %s58, %s59
    %p70 = scmp.eq.s32.totalorder %s24, 0
    %p71 = por %p69, %p70
    %p72 = scmp.ne.s32.totalorder %s58, %s59
    %p73 = scmp.eq.s32.totalorder %s25, 3
    %p74 = por %p72, %p73
    %p76 = scmp.ne.s32.totalorder %s59, %s75
    %p77 = scmp.eq.s32.totalorder %s25, 0
    %p78 = por %p76, %p77
    %s80 = sadd.s32 %s79, 1
    %p83 = scmp.eq.s32.totalorder %s19, 3
    %p84 = scmp.ne.s32.totalorder %s79, %s81
    %p85 = scmp.eq.s32.totalorder %s19, 0
    %p86 = por %p84, %p85
    %p87 = scmp.ne.s32.totalorder %s79, %s81
    %p88 = scmp.eq.s32.totalorder %s24, 3
    %p89 = por %p87, %p88
    %p90 = scmp.ne.s32.totalorder %s81, %s82
    %p91 = scmp.eq.s32.totalorder %s24, 0
    %p92 = por %p90, %p91
    %p93 = scmp.ne.s32.totalorder %s81, %s82
    %p94 = scmp.eq.s32.totalorder %s25, 3
    %p95 = por %p93, %p94
    %p97 = scmp.ne.s32.totalorder %s82, %s96
    %p98 = scmp.eq.s32.totalorder %s25, 0
    %p99 = por %p97, %p98
    %s101 = sadd.s32 %s100, 1
    %p104 = scmp.eq.s32.totalorder %s19, 3
    %p105 = scmp.ne.s32.totalorder %s100, %s102
    %p106 = scmp.eq.s32.totalorder %s19, 0
    %p107 = por %p105, %p106
    %p108 = scmp.ne.s32.totalorder %s100, %s102
    %p109 = scmp.eq.s32.totalorder %s24, 3
    %p110 = por %p108, %p109
    %p111 = scmp.ne.s32.totalorder %s102, %s103
    %p112 = scmp.eq.s32.totalorder %s24, 0
    %p113 = por %p111, %p112
    %p114 = scmp.ne.s32.totalorder %s102, %s103
    %p115 = scmp.eq.s32.totalorder %s25, 3
    %p116 = por %p114, %p115
    %p118 = scmp.ne.s32.totalorder %s103, %s117
    %p119 = scmp.eq.s32.totalorder %s25, 0
    %p120 = por %p118, %p119
    %s122 = sadd.s32 %s121, 1
    %p125 = scmp.eq.s32.totalorder %s19, 3
    %p126 = scmp.ne.s32.totalorder %s121, %s123
    %p127 = scmp.eq.s32.totalorder %s19, 0
    %p128 = por %p126, %p127
    %p129 = scmp.ne.s32.totalorder %s121, %s123
    %p130 = scmp.eq.s32.totalorder %s24, 3
    %p131 = por %p129, %p130
    %p132 = scmp.ne.s32.totalorder %s123, %s124
    %p133 = scmp.eq.s32.totalorder %s24, 0
    %p134 = por %p132, %p133
    %p135 = scmp.ne.s32.totalorder %s123, %s124
    %p136 = scmp.eq.s32.totalorder %s25, 3
    %p137 = por %p135, %p136
    %p139 = scmp.ne.s32.totalorder %s124, %s138
    %p140 = scmp.eq.s32.totalorder %s25, 0
    %p141 = por %p139, %p140
    %s143 = sadd.s32 %s142, 1
    %p146 = scmp.eq.s32.totalorder %s19, 3
    %p147 = scmp.ne.s32.totalorder %s142, %s144
    %p148 = scmp.eq.s32.totalorder %s19, 0
    %p149 = por %p147, %p148
    %p150 = scmp.ne.s32.totalorder %s142, %s144
    %p151 = scmp.eq.s32.totalorder %s24, 3
    %p152 = por %p150, %p151
    %p153 = scmp.ne.s32.totalorder %s144, %s145
    %p154 = scmp.eq.s32.totalorder %s24, 0
    %p155 = por %p153, %p154
    %p156 = scmp.ne.s32.totalorder %s144, %s145
    %p157 = scmp.eq.s32.totalorder %s25, 3
    %p158 = por %p156, %p157
    %p160 = scmp.ne.s32.totalorder %s145, %s159
    %p161 = scmp.eq.s32.totalorder %s25, 0
    %p162 = por %p160, %p161
    %s164 = sadd.s32 %s163, 1
    %p167 = scmp.eq.s32.totalorder %s19, 3
    %p168 = scmp.ne.s32.totalorder %s163, %s165
    %p169 = scmp.eq.s32.totalorder %s19, 0
    %p170 = por %p168, %p169
    %p171 = scmp.ne.s32.totalorder %s163, %s165
    %p172 = scmp.eq.s32.totalorder %s24, 3
    %p173 = por %p171, %p172
    %p174 = scmp.ne.s32.totalorder %s165, %s166
    %p175 = scmp.eq.s32.totalorder %s24, 0
    %p176 = por %p174, %p175
    %p177 = scmp.ne.s32.totalorder %s165, %s166
    %p178 = scmp.eq.s32.totalorder %s25, 3
    %p179 = por %p177, %p178
    %p181 = scmp.ne.s32.totalorder %s166, %s180
    %p182 = scmp.eq.s32.totalorder %s25, 0
    %p183 = por %p181, %p182
    %s185 = sadd.s32 %s184, 1
    %p188 = scmp.eq.s32.totalorder %s19, 3
    %p189 = scmp.ne.s32.totalorder %s184, %s186
    %p190 = scmp.eq.s32.totalorder %s19, 0
    %p191 = por %p189, %p190
    %p192 = scmp.ne.s32.totalorder %s184, %s186
    %p193 = scmp.eq.s32.totalorder %s24, 3
    %p194 = por %p192, %p193
    %p195 = scmp.ne.s32.totalorder %s186, %s187
    %p196 = scmp.eq.s32.totalorder %s24, 0
    %p197 = por %p195, %p196
    %p198 = scmp.ne.s32.totalorder %s186, %s187
    %p199 = scmp.eq.s32.totalorder %s25, 3
    %p200 = por %p198, %p199
    %p202 = scmp.ne.s32.totalorder %s187, %s201
    %p203 = scmp.eq.s32.totalorder %s25, 0
    %p204 = por %p202, %p203
    %s206 = sadd.s32 %s205, 1
    %p209 = scmp.eq.s32.totalorder %s19, 3
    %p210 = scmp.ne.s32.totalorder %s205, %s207
    %p211 = scmp.eq.s32.totalorder %s19, 0
    %p212 = por %p210, %p211
    %p213 = scmp.ne.s32.totalorder %s205, %s207
    %p214 = scmp.eq.s32.totalorder %s24, 3
    %p215 = por %p213, %p214
    %p216 = scmp.ne.s32.totalorder %s207, %s208
    %p217 = scmp.eq.s32.totalorder %s24, 0
    %p218 = por %p216, %p217
    %p219 = scmp.ne.s32.totalorder %s207, %s208
    %p220 = scmp.eq.s32.totalorder %s25, 3
    %p221 = por %p219, %p220
    %p223 = scmp.ne.s32.totalorder %s208, %s222
    %p224 = scmp.eq.s32.totalorder %s25, 0
    %p225 = por %p223, %p224
    %s227 = sadd.s32 %s226, 1
    %p230 = scmp.eq.s32.totalorder %s19, 3
    %p231 = scmp.ne.s32.totalorder %s226, %s228
    %p232 = scmp.eq.s32.totalorder %s19, 0
    %p233 = por %p231, %p232
    %p234 = scmp.ne.s32.totalorder %s226, %s228
    %p235 = scmp.eq.s32.totalorder %s24, 3
    %p236 = por %p234, %p235
    %p237 = scmp.ne.s32.totalorder %s228, %s229
    %p238 = scmp.eq.s32.totalorder %s24, 0
    %p239 = por %p237, %p238
    %p240 = scmp.ne.s32.totalorder %s228, %s229
    %p241 = scmp.eq.s32.totalorder %s25, 3
    %p242 = por %p240, %p241
    %p244 = scmp.ne.s32.totalorder %s229, %s243
    %p245 = scmp.eq.s32.totalorder %s25, 0
    %p246 = por %p244, %p245
    %s247 = ssub.s32 %s19, %s26
    %p248 = scmp.eq.s32.totalorder %s247, 0
    %s250 = sadd.s32 %s249, 1
    %s251 = scalar_select %p248, %s249, %s250
    %p254 = pneg %p248
    %p255 = scmp.eq.s32.totalorder %s19, 3
    %p256 = por %p254, %p255
    %p257 = scmp.ne.s32.totalorder %s249, %s252
    %p258 = scmp.eq.s32.totalorder %s19, 0
    %p259 = por %p257, %p258
    %p260 = scmp.ne.s32.totalorder %s249, %s252
    %p261 = scmp.eq.s32.totalorder %s24, 3
    %p262 = por %p260, %p261
    %p263 = scmp.ne.s32.totalorder %s252, %s253
    %p264 = scmp.eq.s32.totalorder %s24, 0
    %p265 = por %p263, %p264
    %p266 = scmp.ne.s32.totalorder %s252, %s253
    %p267 = scmp.eq.s32.totalorder %s25, 3
    %p268 = por %p266, %p267
    %p270 = scmp.ne.s32.totalorder %s253, %s269
    %p271 = scmp.eq.s32.totalorder %s25, 0
    %p272 = por %p270, %p271
    %s273 = ssub.s32 %s19, %s26
    %p274 = scmp.eq.s32.totalorder %s273, 0
    %s276 = sadd.s32 %s275, 1
    %s277 = scalar_select %p274, %s275, %s276
    %p280 = pneg %p274
    %p281 = scmp.eq.s32.totalorder %s19, 3
    %p282 = por %p280, %p281
    %p283 = scmp.ne.s32.totalorder %s275, %s278
    %p284 = scmp.eq.s32.totalorder %s19, 0
    %p285 = por %p283, %p284
    %p286 = scmp.ne.s32.totalorder %s275, %s278
    %p287 = scmp.eq.s32.totalorder %s24, 3
    %p288 = por %p286, %p287
    %p289 = scmp.ne.s32.totalorder %s278, %s279
    %p290 = scmp.eq.s32.totalorder %s24, 0
    %p291 = por %p289, %p290
    %p292 = scmp.ne.s32.totalorder %s278, %s279
    %p293 = scmp.eq.s32.totalorder %s25, 3
    %p294 = por %p292, %p293
    %p296 = scmp.ne.s32.totalorder %s279, %s295
    %p297 = scmp.eq.s32.totalorder %s25, 0
    %p298 = por %p296, %p297
    %s299 = ssub.s32 %s19, %s26
    %p300 = scmp.eq.s32.totalorder %s299, 0
    %s302 = sadd.s32 %s301, 1
    %s303 = scalar_select %p300, %s301, %s302
    %p306 = pneg %p300
    %p307 = scmp.eq.s32.totalorder %s19, 3
    %p308 = por %p306, %p307
    %p309 = scmp.ne.s32.totalorder %s301, %s304
    %p310 = scmp.eq.s32.totalorder %s19, 0
    %p311 = por %p309, %p310
    %p312 = scmp.ne.s32.totalorder %s301, %s304
    %p313 = scmp.eq.s32.totalorder %s24, 3
    %p314 = por %p312, %p313
    %p315 = scmp.ne.s32.totalorder %s304, %s305
    %p316 = scmp.eq.s32.totalorder %s24, 0
    %p317 = por %p315, %p316
    %p318 = scmp.ne.s32.totalorder %s304, %s305
    %p319 = scmp.eq.s32.totalorder %s25, 3
    %p320 = por %p318, %p319
    %p322 = scmp.ne.s32.totalorder %s305, %s321
    %p323 = scmp.eq.s32.totalorder %s25, 0
    %p324 = por %p322, %p323
    %p325 = scmp.le.s32.totalorder 1, %s19
    %p326 = scmp.lt.s32.totalorder %s19, 5
    %p327 = pnand %p325, %p326
    %p328 = pneg %p327
    // Predicated region
    $region9: #{vae_forward.1} parent=5 // pred_check
      _
    $region10: #{vae_forward.1} parent=5 // pred_check_branch
      %330 = sbr.rel (%p327) target = $region12
    $region11: #{vae_forward.1} parent=5 // pred_region
      %s331 = ssub.s32 %s19, 1
      // Predicated region
      $region13: #{vae_forward.1} parent=11 // pred_check
        %p332 = pneg %p92
      $region14: #{vae_forward.1} parent=11 // pred_check_branch
        %334 = sbr.rel (%p332) target = $region16
      $region15: #{vae_forward.1} parent=11 // pred_region
        _
      $region16: #{vae_forward.1} parent=11 // pred_fallthru
        _
      // Predicated region
      $region17: #{vae_forward.1} parent=11 // pred_check
        %p335 = pneg %p113
      $region18: #{vae_forward.1} parent=11 // pred_check_branch
        %337 = sbr.rel (%p335) target = $region20
      $region19: #{vae_forward.1} parent=11 // pred_region
        _
      $region20: #{vae_forward.1} parent=11 // pred_fallthru
        _
      // Predicated region
      $region21: #{vae_forward.1} parent=11 // pred_check
        %p338 = pneg %p134
      $region22: #{vae_forward.1} parent=11 // pred_check_branch
        %340 = sbr.rel (%p338) target = $region24
      $region23: #{vae_forward.1} parent=11 // pred_region
        _
      $region24: #{vae_forward.1} parent=11 // pred_fallthru
        _
      // Predicated region
      $region25: #{vae_forward.1} parent=11 // pred_check
        %p341 = pneg %p155
      $region26: #{vae_forward.1} parent=11 // pred_check_branch
        %343 = sbr.rel (%p341) target = $region28
      $region27: #{vae_forward.1} parent=11 // pred_region
        _
      $region28: #{vae_forward.1} parent=11 // pred_fallthru
        _
      // Predicated region
      $region29: #{vae_forward.1} parent=11 // pred_check
        %p344 = pneg %p176
      $region30: #{vae_forward.1} parent=11 // pred_check_branch
        %346 = sbr.rel (%p344) target = $region32
      $region31: #{vae_forward.1} parent=11 // pred_region
        _
      $region32: #{vae_forward.1} parent=11 // pred_fallthru
        _
      // Predicated region
      $region33: #{vae_forward.1} parent=11 // pred_check
        %p347 = pneg %p197
      $region34: #{vae_forward.1} parent=11 // pred_check_branch
        %349 = sbr.rel (%p347) target = $region36
      $region35: #{vae_forward.1} parent=11 // pred_region
        _
      $region36: #{vae_forward.1} parent=11 // pred_fallthru
        _
      // Predicated region
      $region37: #{vae_forward.1} parent=11 // pred_check
        %p350 = pneg %p218
      $region38: #{vae_forward.1} parent=11 // pred_check_branch
        %352 = sbr.rel (%p350) target = $region40
      $region39: #{vae_forward.1} parent=11 // pred_region
        _
      $region40: #{vae_forward.1} parent=11 // pred_fallthru
        _
      // Predicated region
      $region41: #{vae_forward.1} parent=11 // pred_check
        %p353 = pneg %p239
      $region42: #{vae_forward.1} parent=11 // pred_check_branch
        %355 = sbr.rel (%p353) target = $region44
      $region43: #{vae_forward.1} parent=11 // pred_region
        _
      $region44: #{vae_forward.1} parent=11 // pred_fallthru
        _
    $region12: #{vae_forward.1} parent=5 // pred_fallthru
      _
    %p356 = scmp.lt.s32.totalorder %s19, 4
    // Predicated region
    $region45: #{vae_forward.1} parent=5 // pred_check
      %p357 = pneg %p356
    $region46: #{vae_forward.1} parent=5 // pred_check_branch
      %359 = sbr.rel (%p357) target = $region48
    $region47: #{vae_forward.1} parent=5 // pred_region
      // Predicated region
      $region49: #{vae_forward.1} parent=47 // pred_check
        %p360 = pneg %p39
      $region50: #{vae_forward.1} parent=47 // pred_check_branch
        %362 = sbr.rel (%p360) target = $region52
      $region51: #{vae_forward.1} parent=47 // pred_region
        %s363 = smul.u32 16, %s19
        %p364 = scmp.lt.s32.totalorder %s363, 63
        %s365 = scalar_select %p364, %s363, 63
        %s366 = smul.addr %s365, 4
        %s367 = scalar_lea.vmem %s0, %s366
        %s368 = smul.u32 16, %s19
      $region52: #{vae_forward.1} parent=47 // pred_fallthru
        _
      // Predicated region
      $region53: #{vae_forward.1} parent=47 // pred_check
        %p369 = pneg %p65
      $region54: #{vae_forward.1} parent=47 // pred_check_branch
        %371 = sbr.rel (%p369) target = $region56
      $region55: #{vae_forward.1} parent=47 // pred_region
        %s372 = smul.u32 16, %s19
        %p373 = scmp.lt.s32.totalorder %s372, 63
        %s374 = scalar_select %p373, %s372, 63
        %s375 = smul.addr %s374, 4
        %s376 = scalar_lea.vmem %s1, %s375
        %s377 = smul.u32 16, %s19
      $region56: #{vae_forward.1} parent=47 // pred_fallthru
        _
    $region48: #{vae_forward.1} parent=5 // pred_fallthru
      _
    %p378 = scmp.le.s32.totalorder 1, %s19
    %p379 = scmp.lt.s32.totalorder %s19, 5
    %p380 = pnand %p378, %p379
    %p381 = pneg %p380
    // Predicated region
    $region57: #{vae_forward.1} parent=5 // pred_check
      _
    $region58: #{vae_forward.1} parent=5 // pred_check_branch
      %383 = sbr.rel (%p380) target = $region60
    $region59: #{vae_forward.1} parent=5 // pred_region
      %s384 = ssub.s32 %s19, 1
      %s385 = smul.u32 16, %s24
      %p386 = scmp.lt.s32.totalorder %s385, 63
      %s387 = scalar_select %p386, %s385, 63
      %s388 = smul.addr %s387, 4
      %s389 = scalar_lea.vmem %s0, %s388
      %p390 = pneg %p45
      %p391 = pneg %p42
      %s392 = smul.u32 16, %s24
      %p393 = scmp.lt.s32.totalorder %s392, 63
      %s394 = scalar_select %p393, %s392, 63
      %s395 = smul.addr %s394, 4
      %s396 = scalar_lea.vmem %s1, %s395
      %p397 = pneg %p71
      %p398 = pneg %p68
      %p399 = pneg %p92
      %p400 = pneg %p89
      %p401 = pneg %p113
      %p402 = pneg %p110
      %p403 = pneg %p134
      %p404 = pneg %p131
      %p405 = pneg %p155
      %p406 = pneg %p152
      %p407 = pneg %p176
      %p408 = pneg %p173
      %p409 = pneg %p197
      %p410 = pneg %p194
      %p411 = pneg %p218
      %p412 = pneg %p215
      %p413 = pneg %p239
      %p414 = pneg %p236
      %p415 = pneg %p265
      %p416 = pneg %p262
      %s417 = smul.u32 16, %s24
      %p418 = scmp.lt.s32.totalorder %s417, 63
      %s419 = scalar_select %p418, %s417, 63
      %s420 = smul.addr %s419, 8
      %s421 = scalar_lea.vmem %s10, %s420
      %p422 = pneg %p291
      %p423 = pneg %p288
      %s424 = smul.u32 16, %s24
      %p425 = scmp.lt.s32.totalorder %s424, 63
      %s426 = scalar_select %p425, %s424, 63
      %s427 = smul.addr %s426, 8
      %s428 = scalar_lea.vmem %s11, %s427
      %p429 = pneg %p317
      %p430 = pneg %p314
      %s431 = smul.u32 16, %s24
      %p432 = scmp.lt.s32.totalorder %s431, 63
      %s433 = scalar_select %p432, %s431, 63
      %s434 = smul.addr %s433, 8
      %s435 = scalar_lea.vmem %s12, %s434
      %s436 = smul.u32 16, %s24
      %p437 = scmp.lt.s32.totalorder %s436, 63
      %s438 = scalar_select %p437, %s436, 63
      %s439 = smul.addr %s438, 4
      %s440 = scalar_lea.vmem %s0, %s439
      %s441 = smul.u32 16, %s24
      %s442 = smul.u32 16, %s24
      %p443 = scmp.lt.s32.totalorder %s442, 63
      %s444 = scalar_select %p443, %s442, 63
      %s445 = smul.addr %s444, 4
      %s446 = scalar_lea.vmem %s1, %s445
      %s447 = smul.u32 16, %s24
      %s448 = smul.u32 16, %s24
      %p449 = scmp.lt.s32.totalorder %s448, 63
      %s450 = scalar_select %p449, %s448, 63
      %s451 = smul.addr %s450, 8
      %s452 = scalar_lea.vmem %s10, %s451
      %s453 = smul.u32 16, %s24
      %s454 = smul.u32 16, %s24
      %p455 = scmp.lt.s32.totalorder %s454, 63
      %s456 = scalar_select %p455, %s454, 63
      %s457 = smul.addr %s456, 8
      %s458 = scalar_lea.vmem %s11, %s457
      %s459 = smul.u32 16, %s24
      %s460 = smul.u32 16, %s24
      %p461 = scmp.lt.s32.totalorder %s460, 63
      %s462 = scalar_select %p461, %s460, 63
      %s463 = smul.addr %s462, 8
      %s464 = scalar_lea.vmem %s12, %s463
      %s465 = smul.u32 16, %s24
      %v466 = vld [vmem:[%s440] sm:$0xf]
      %v467 = vld [vmem:[%s440 + $0x4] sm:$0xf]
      %v468 = vld [vmem:[%s440 + $0x8] sm:$0xf]
      %v469 = vld [vmem:[%s440 + $0xc] sm:$0xf]
      %v470 = vld [vmem:[%s440 + $0x10] sm:$0xf]
      %v471 = vld [vmem:[%s440 + $0x14] sm:$0xf]
      %v472 = vld [vmem:[%s440 + $0x18] sm:$0xf]
      %v473 = vld [vmem:[%s440 + $0x1c] sm:$0xf]
      %v474 = vld [vmem:[%s440 + $0x20] sm:$0xf]
      %v475 = vld [vmem:[%s440 + $0x24] sm:$0xf]
      %v476 = vld [vmem:[%s440 + $0x28] sm:$0xf]
      %v477 = vld [vmem:[%s440 + $0x2c] sm:$0xf]
      %v478 = vld [vmem:[%s440 + $0x30] sm:$0xf]
      %v479 = vld [vmem:[%s440 + $0x34] sm:$0xf]
      %v480 = vld [vmem:[%s440 + $0x38] sm:$0xf]
      %v481 = vld [vmem:[%s440 + $0x3c] sm:$0xf]
      %v482 = vld [vmem:[%s2] sm:$0xf]
      %v483 = vld [vmem:[%s2 + $0x4] sm:$0xf]
      %v484 = vld [vmem:[%s2 + $0x8] sm:$0xf]
      %v485 = vld [vmem:[%s2 + $0xc] sm:$0xf]
      %v486 = vld [vmem:[%s2 + $0x10] sm:$0xf]
      %v487 = vld [vmem:[%s2 + $0x14] sm:$0xf]
      %v488 = vld [vmem:[%s2 + $0x18] sm:$0xf]
      %v489 = vld [vmem:[%s2 + $0x1c] sm:$0xf]
      %v490 = vld [vmem:[%s2 + $0x20] sm:$0xf]
      %v491 = vld [vmem:[%s2 + $0x24] sm:$0xf]
      %v492 = vld [vmem:[%s2 + $0x28] sm:$0xf]
      %v493 = vld [vmem:[%s2 + $0x2c] sm:$0xf]
      %v494 = vld [vmem:[%s2 + $0x30] sm:$0xf]
      %v495 = vld [vmem:[%s2 + $0x34] sm:$0xf]
      %v496 = vld [vmem:[%s2 + $0x38] sm:$0xf]
      %v497 = vld [vmem:[%s2 + $0x3c] sm:$0xf]
      %v498 = vld [vmem:[%s3] sm:$0x1]
      %v500 = vperm.slane %v498, 0
      %v518 = vunpack.c.l.b16 %v466
      %v519 = vunpack.c.l.b16 %v467
      %v520 = vunpack.c.l.b16 %v468
      %v521 = vunpack.c.l.b16 %v469
      %v522 = vunpack.c.l.b16 %v470
      %v523 = vunpack.c.l.b16 %v471
      %v524 = vunpack.c.l.b16 %v472
      %v525 = vunpack.c.l.b16 %v473
      %v526 = vunpack.c.l.b16 %v474
      %v527 = vunpack.c.l.b16 %v475
      %v528 = vunpack.c.l.b16 %v476
      %v529 = vunpack.c.l.b16 %v477
      %v530 = vunpack.c.l.b16 %v478
      %v531 = vunpack.c.l.b16 %v479
      %v532 = vunpack.c.l.b16 %v480
      %v533 = vunpack.c.l.b16 %v481
      %v534 = vpack.c.b16 %v519, %v518
      %v535 = vpack.c.b16 %v521, %v520
      %v536 = vpack.c.b16 %v523, %v522
      %v537 = vpack.c.b16 %v525, %v524
      %v538 = vpack.c.b16 %v527, %v526
      %v539 = vpack.c.b16 %v529, %v528
      %v540 = vpack.c.b16 %v531, %v530
      %v541 = vpack.c.b16 %v533, %v532
      %v566 = vunpack.c.l.b16 %v482
      %v567 = vunpack.c.l.b16 %v483
      %v568 = vunpack.c.l.b16 %v484
      %v569 = vunpack.c.l.b16 %v485
      %v570 = vunpack.c.l.b16 %v486
      %v571 = vunpack.c.l.b16 %v487
      %v572 = vunpack.c.l.b16 %v488
      %v573 = vunpack.c.l.b16 %v489
      %v574 = vunpack.c.l.b16 %v490
      %v575 = vunpack.c.l.b16 %v491
      %v576 = vunpack.c.l.b16 %v492
      %v577 = vunpack.c.l.b16 %v493
      %v578 = vunpack.c.l.b16 %v494
      %v579 = vunpack.c.l.b16 %v495
      %v580 = vunpack.c.l.b16 %v496
      %v581 = vunpack.c.l.b16 %v497
      %v582 = vpack.c.b16 %v567, %v566
      %v583 = vpack.c.b16 %v569, %v568
      %v584 = vpack.c.b16 %v571, %v570
      %v585 = vpack.c.b16 %v573, %v572
      %v586 = vpack.c.b16 %v575, %v574
      %v587 = vpack.c.b16 %v577, %v576
      %v588 = vpack.c.b16 %v579, %v578
      %v589 = vpack.c.b16 %v581, %v580
      %598 = vmatpush.bf16.msra.mxu0 %v589
      %599 = vmatpush.bf16.msra.mxu0 %v588
      %600 = vmatpush.bf16.msra.mxu0 %v587
      %601 = vmatpush.bf16.msra.mxu0 %v586
      %602 = vmatpush.bf16.msra.mxu0 %v585
      %603 = vmatpush.bf16.msra.mxu0 %v584
      %604 = vmatpush.bf16.msra.mxu0 %v583
      %605 = vmatpush.bf16.msra.mxu0 %v582
      %606 = vmatmul.bf16.gmra.mxu0 %v534
      %v607 = vpop.f32.mrf.mxu0
      %v608 = vadd.f32 %v500, %v607
      %v609 = vpop.f32.mrf.mxu0
      %v610 = vadd.f32 %v500, %v609
      %611 = vmatmul.bf16.gmra.mxu0 %v535
      %v612 = vpop.f32.mrf.mxu0
      %v613 = vadd.f32 %v500, %v612
      %v614 = vpop.f32.mrf.mxu0
      %v615 = vadd.f32 %v500, %v614
      %616 = vmatmul.bf16.gmra.mxu0 %v536
      %v617 = vpop.f32.mrf.mxu0
      %v618 = vadd.f32 %v500, %v617
      %v619 = vpop.f32.mrf.mxu0
      %v620 = vadd.f32 %v500, %v619
      %621 = vmatmul.bf16.gmra.mxu0 %v537
      %v622 = vpop.f32.mrf.mxu0
      %v623 = vadd.f32 %v500, %v622
      %v624 = vpop.f32.mrf.mxu0
      %v625 = vadd.f32 %v500, %v624
      %626 = vmatmul.bf16.gmra.mxu0 %v538
      %v627 = vpop.f32.mrf.mxu0
      %v628 = vadd.f32 %v500, %v627
      %v629 = vpop.f32.mrf.mxu0
      %v630 = vadd.f32 %v500, %v629
      %631 = vmatmul.bf16.gmra.mxu0 %v539
      %v632 = vpop.f32.mrf.mxu0
      %v633 = vadd.f32 %v500, %v632
      %v634 = vpop.f32.mrf.mxu0
      %v635 = vadd.f32 %v500, %v634
      %636 = vmatmul.bf16.gmra.mxu0 %v540
      %v637 = vpop.f32.mrf.mxu0
      %v638 = vadd.f32 %v500, %v637
      %v639 = vpop.f32.mrf.mxu0
      %v640 = vadd.f32 %v500, %v639
      %641 = vmatmul.bf16.gmra.mxu0 %v541
      %v642 = vpop.f32.mrf.mxu0
      %v643 = vadd.f32 %v500, %v642
      %v644 = vpop.f32.mrf.mxu0
      %v645 = vadd.f32 %v500, %v644
      %646 = vdwg.mxu0
      %v647 = vmax.f32 %v608, 0.0
      %v648 = vmax.f32 %v610, 0.0
      %v649 = vmax.f32 %v613, 0.0
      %v650 = vmax.f32 %v615, 0.0
      %v651 = vmax.f32 %v618, 0.0
      %v652 = vmax.f32 %v620, 0.0
      %v653 = vmax.f32 %v623, 0.0
      %v654 = vmax.f32 %v625, 0.0
      %v655 = vmax.f32 %v628, 0.0
      %v656 = vmax.f32 %v630, 0.0
      %v657 = vmax.f32 %v633, 0.0
      %v658 = vmax.f32 %v635, 0.0
      %v659 = vmax.f32 %v638, 0.0
      %v660 = vmax.f32 %v640, 0.0
      %v661 = vmax.f32 %v643, 0.0
      %v662 = vmax.f32 %v645, 0.0
      %v663 = vpack.c.bf16 %v648, %v647
      %v664 = vpack.c.bf16 %v650, %v649
      %v665 = vpack.c.bf16 %v652, %v651
      %v666 = vpack.c.bf16 %v654, %v653
      %v667 = vpack.c.bf16 %v656, %v655
      %v668 = vpack.c.bf16 %v658, %v657
      %v669 = vpack.c.bf16 %v660, %v659
      %v670 = vpack.c.bf16 %v662, %v661
      %v671 = vld [vmem:[%s4] sm:$0xff]
      %v672 = vld [vmem:[%s4 + $0x8] sm:$0xff]
      %v673 = vld [vmem:[%s4 + $0x10] sm:$0xff]
      %v674 = vld [vmem:[%s4 + $0x18] sm:$0xff]
      %v675 = vld [vmem:[%s4 + $0x20] sm:$0xff]
      %v676 = vld [vmem:[%s4 + $0x28] sm:$0xff]
      %v677 = vld [vmem:[%s4 + $0x30] sm:$0xff]
      %v678 = vld [vmem:[%s4 + $0x38] sm:$0xff]
      %v679 = vld [vmem:[%s4 + $0x40] sm:$0xff]
      %v680 = vld [vmem:[%s4 + $0x48] sm:$0xff]
      %v681 = vld [vmem:[%s4 + $0x50] sm:$0xff]
      %v682 = vld [vmem:[%s4 + $0x58] sm:$0xff]
      %v683 = vld [vmem:[%s4 + $0x60] sm:$0xff]
      %v684 = vld [vmem:[%s4 + $0x68] sm:$0xff]
      %v685 = vld [vmem:[%s4 + $0x70] sm:$0xff]
      %v686 = vld [vmem:[%s4 + $0x78] sm:$0xff]
      %v687 = vld [vmem:[%s5] sm:$0x3]
      %v689 = vperm.slane %v687, 0
      %v690 = vperm.slane %v687, 1
      %v709 = vunpack.c.l.b16 %v671
      %v710 = vunpack.c.h.b16 %v671
      %v711 = vunpack.c.l.b16 %v672
      %v712 = vunpack.c.h.b16 %v672
      %v713 = vunpack.c.l.b16 %v673
      %v714 = vunpack.c.h.b16 %v673
      %v715 = vunpack.c.l.b16 %v674
      %v716 = vunpack.c.h.b16 %v674
      %v717 = vunpack.c.l.b16 %v675
      %v718 = vunpack.c.h.b16 %v675
      %v719 = vunpack.c.l.b16 %v676
      %v720 = vunpack.c.h.b16 %v676
      %v721 = vunpack.c.l.b16 %v677
      %v722 = vunpack.c.h.b16 %v677
      %v723 = vunpack.c.l.b16 %v678
      %v724 = vunpack.c.h.b16 %v678
      %v725 = vunpack.c.l.b16 %v679
      %v726 = vunpack.c.h.b16 %v679
      %v727 = vunpack.c.l.b16 %v680
      %v728 = vunpack.c.h.b16 %v680
      %v729 = vunpack.c.l.b16 %v681
      %v730 = vunpack.c.h.b16 %v681
      %v731 = vunpack.c.l.b16 %v682
      %v732 = vunpack.c.h.b16 %v682
      %v733 = vunpack.c.l.b16 %v683
      %v734 = vunpack.c.h.b16 %v683
      %v735 = vunpack.c.l.b16 %v684
      %v736 = vunpack.c.h.b16 %v684
      %v737 = vunpack.c.l.b16 %v685
      %v738 = vunpack.c.h.b16 %v685
      %v739 = vunpack.c.l.b16 %v686
      %v740 = vunpack.c.h.b16 %v686
      %v741 = vpack.c.b16 %v711, %v709
      %v742 = vpack.c.b16 %v712, %v710
      %v743 = vpack.c.b16 %v715, %v713
      %v744 = vpack.c.b16 %v716, %v714
      %v745 = vpack.c.b16 %v719, %v717
      %v746 = vpack.c.b16 %v720, %v718
      %v747 = vpack.c.b16 %v723, %v721
      %v748 = vpack.c.b16 %v724, %v722
      %v749 = vpack.c.b16 %v727, %v725
      %v750 = vpack.c.b16 %v728, %v726
      %v751 = vpack.c.b16 %v731, %v729
      %v752 = vpack.c.b16 %v732, %v730
      %v753 = vpack.c.b16 %v735, %v733
      %v754 = vpack.c.b16 %v736, %v734
      %v755 = vpack.c.b16 %v739, %v737
      %v756 = vpack.c.b16 %v740, %v738
      %773 = vmatpush.bf16.msra.mxu0 %v755
      %774 = vmatpush.bf16.msra.mxu0 %v753
      %775 = vmatpush.bf16.msra.mxu0 %v751
      %776 = vmatpush.bf16.msra.mxu0 %v749
      %777 = vmatpush.bf16.msra.mxu0 %v747
      %778 = vmatpush.bf16.msra.mxu0 %v745
      %779 = vmatpush.bf16.msra.mxu0 %v743
      %780 = vmatpush.bf16.msra.mxu0 %v741
      %781 = vmatmul.bf16.gmra.mxu0 %v663
      %v782 = vpop.f32.mrf.mxu0
      %v783 = vadd.f32 %v689, %v782
      %v784 = vpop.f32.mrf.mxu0
      %v785 = vadd.f32 %v689, %v784
      %786 = vmatmul.bf16.gmra.mxu0 %v664
      %v787 = vpop.f32.mrf.mxu0
      %v788 = vadd.f32 %v689, %v787
      %v789 = vpop.f32.mrf.mxu0
      %v790 = vadd.f32 %v689, %v789
      %791 = vmatmul.bf16.gmra.mxu0 %v665
      %v792 = vpop.f32.mrf.mxu0
      %v793 = vadd.f32 %v689, %v792
      %v794 = vpop.f32.mrf.mxu0
      %v795 = vadd.f32 %v689, %v794
      %796 = vmatmul.bf16.gmra.mxu0 %v666
      %v797 = vpop.f32.mrf.mxu0
      %v798 = vadd.f32 %v689, %v797
      %v799 = vpop.f32.mrf.mxu0
      %v800 = vadd.f32 %v689, %v799
      %801 = vmatmul.bf16.gmra.mxu0 %v667
      %v802 = vpop.f32.mrf.mxu0
      %v803 = vadd.f32 %v689, %v802
      %v804 = vpop.f32.mrf.mxu0
      %v805 = vadd.f32 %v689, %v804
      %806 = vmatmul.bf16.gmra.mxu0 %v668
      %v807 = vpop.f32.mrf.mxu0
      %v808 = vadd.f32 %v689, %v807
      %v809 = vpop.f32.mrf.mxu0
      %v810 = vadd.f32 %v689, %v809
      %811 = vmatmul.bf16.gmra.mxu0 %v669
      %v812 = vpop.f32.mrf.mxu0
      %v813 = vadd.f32 %v689, %v812
      %v814 = vpop.f32.mrf.mxu0
      %v815 = vadd.f32 %v689, %v814
      %816 = vmatmul.bf16.gmra.mxu0 %v670
      %v817 = vpop.f32.mrf.mxu0
      %v818 = vadd.f32 %v689, %v817
      %v819 = vpop.f32.mrf.mxu0
      %v820 = vadd.f32 %v689, %v819
      %821 = vdwg.mxu0
      %822 = vmatpush.bf16.msra.mxu0 %v756
      %823 = vmatpush.bf16.msra.mxu0 %v754
      %824 = vmatpush.bf16.msra.mxu0 %v752
      %825 = vmatpush.bf16.msra.mxu0 %v750
      %826 = vmatpush.bf16.msra.mxu0 %v748
      %827 = vmatpush.bf16.msra.mxu0 %v746
      %828 = vmatpush.bf16.msra.mxu0 %v744
      %829 = vmatpush.bf16.msra.mxu0 %v742
      %830 = vmatmul.bf16.gmra.mxu0 %v663
      %v831 = vpop.f32.mrf.mxu0
      %v832 = vadd.f32 %v690, %v831
      %v833 = vpop.f32.mrf.mxu0
      %v834 = vadd.f32 %v690, %v833
      %835 = vmatmul.bf16.gmra.mxu0 %v664
      %v836 = vpop.f32.mrf.mxu0
      %v837 = vadd.f32 %v690, %v836
      %v838 = vpop.f32.mrf.mxu0
      %v839 = vadd.f32 %v690, %v838
      %840 = vmatmul.bf16.gmra.mxu0 %v665
      %v841 = vpop.f32.mrf.mxu0
      %v842 = vadd.f32 %v690, %v841
      %v843 = vpop.f32.mrf.mxu0
      %v844 = vadd.f32 %v690, %v843
      %845 = vmatmul.bf16.gmra.mxu0 %v666
      %v846 = vpop.f32.mrf.mxu0
      %v847 = vadd.f32 %v690, %v846
      %v848 = vpop.f32.mrf.mxu0
      %v849 = vadd.f32 %v690, %v848
      %850 = vmatmul.bf16.gmra.mxu0 %v667
      %v851 = vpop.f32.mrf.mxu0
      %v852 = vadd.f32 %v690, %v851
      %v853 = vpop.f32.mrf.mxu0
      %v854 = vadd.f32 %v690, %v853
      %855 = vmatmul.bf16.gmra.mxu0 %v668
      %v856 = vpop.f32.mrf.mxu0
      %v857 = vadd.f32 %v690, %v856
      %v858 = vpop.f32.mrf.mxu0
      %v859 = vadd.f32 %v690, %v858
      %860 = vmatmul.bf16.gmra.mxu0 %v669
      %v861 = vpop.f32.mrf.mxu0
      %v862 = vadd.f32 %v690, %v861
      %v863 = vpop.f32.mrf.mxu0
      %v864 = vadd.f32 %v690, %v863
      %865 = vmatmul.bf16.gmra.mxu0 %v670
      %v866 = vpop.f32.mrf.mxu0
      %v867 = vadd.f32 %v690, %v866
      %v868 = vpop.f32.mrf.mxu0
      %v869 = vadd.f32 %v690, %v868
      %870 = vdwg.mxu0
      %v871 = vmul.f32 %v832, 1.442695
      %v872 = vpow.pop %v871
      %v873 = vmul.f32 %v834, 1.442695
      %v874 = vpow.pop %v873
      %v875 = vmul.f32 %v837, 1.442695
      %v876 = vpow.pop %v875
      %v877 = vmul.f32 %v839, 1.442695
      %v878 = vpow.pop %v877
      %v879 = vmul.f32 %v842, 1.442695
      %v880 = vpow.pop %v879
      %v881 = vmul.f32 %v844, 1.442695
      %v882 = vpow.pop %v881
      %v883 = vmul.f32 %v847, 1.442695
      %v884 = vpow.pop %v883
      %v885 = vmul.f32 %v849, 1.442695
      %v886 = vpow.pop %v885
      %v887 = vmul.f32 %v852, 1.442695
      %v888 = vpow.pop %v887
      %v889 = vmul.f32 %v854, 1.442695
      %v890 = vpow.pop %v889
      %v891 = vmul.f32 %v857, 1.442695
      %v892 = vpow.pop %v891
      %v893 = vmul.f32 %v859, 1.442695
      %v894 = vpow.pop %v893
      %v895 = vmul.f32 %v862, 1.442695
      %v896 = vpow.pop %v895
      %v897 = vmul.f32 %v864, 1.442695
      %v898 = vpow.pop %v897
      %v899 = vmul.f32 %v867, 1.442695
      %v900 = vpow.pop %v899
      %v901 = vmul.f32 %v869, 1.442695
      %v902 = vpow.pop %v901
      %v903 = vld [vmem:[%s446] sm:$0xf]
      %v904 = vld [vmem:[%s446 + $0x4] sm:$0xf]
      %v905 = vld [vmem:[%s446 + $0x8] sm:$0xf]
      %v906 = vld [vmem:[%s446 + $0xc] sm:$0xf]
      %v907 = vld [vmem:[%s446 + $0x10] sm:$0xf]
      %v908 = vld [vmem:[%s446 + $0x14] sm:$0xf]
      %v909 = vld [vmem:[%s446 + $0x18] sm:$0xf]
      %v910 = vld [vmem:[%s446 + $0x1c] sm:$0xf]
      %v911 = vld [vmem:[%s446 + $0x20] sm:$0xf]
      %v912 = vld [vmem:[%s446 + $0x24] sm:$0xf]
      %v913 = vld [vmem:[%s446 + $0x28] sm:$0xf]
      %v914 = vld [vmem:[%s446 + $0x2c] sm:$0xf]
      %v915 = vld [vmem:[%s446 + $0x30] sm:$0xf]
      %v916 = vld [vmem:[%s446 + $0x34] sm:$0xf]
      %v917 = vld [vmem:[%s446 + $0x38] sm:$0xf]
      %v918 = vld [vmem:[%s446 + $0x3c] sm:$0xf]
      %v919 = vunpack.c.l.bf16 %v903
      %v920 = vunpack.c.l.bf16 %v904
      %v921 = vunpack.c.l.bf16 %v905
      %v922 = vunpack.c.l.bf16 %v906
      %v923 = vunpack.c.l.bf16 %v907
      %v924 = vunpack.c.l.bf16 %v908
      %v925 = vunpack.c.l.bf16 %v909
      %v926 = vunpack.c.l.bf16 %v910
      %v927 = vunpack.c.l.bf16 %v911
      %v928 = vunpack.c.l.bf16 %v912
      %v929 = vunpack.c.l.bf16 %v913
      %v930 = vunpack.c.l.bf16 %v914
      %v931 = vunpack.c.l.bf16 %v915
      %v932 = vunpack.c.l.bf16 %v916
      %v933 = vunpack.c.l.bf16 %v917
      %v934 = vunpack.c.l.bf16 %v918
      %v935 = vmul.f32 %v872, %v919
      %v936 = vmul.f32 %v874, %v920
      %v937 = vmul.f32 %v876, %v921
      %v938 = vmul.f32 %v878, %v922
      %v939 = vmul.f32 %v880, %v923
      %v940 = vmul.f32 %v882, %v924
      %v941 = vmul.f32 %v884, %v925
      %v942 = vmul.f32 %v886, %v926
      %v943 = vmul.f32 %v888, %v927
      %v944 = vmul.f32 %v890, %v928
      %v945 = vmul.f32 %v892, %v929
      %v946 = vmul.f32 %v894, %v930
      %v947 = vmul.f32 %v896, %v931
      %v948 = vmul.f32 %v898, %v932
      %v949 = vmul.f32 %v900, %v933
      %v950 = vmul.f32 %v902, %v934
      %v951 = vadd.f32 %v783, %v935
      %v952 = vadd.f32 %v785, %v936
      %v953 = vadd.f32 %v788, %v937
      %v954 = vadd.f32 %v790, %v938
      %v955 = vadd.f32 %v793, %v939
      %v956 = vadd.f32 %v795, %v940
      %v957 = vadd.f32 %v798, %v941
      %v958 = vadd.f32 %v800, %v942
      %v959 = vadd.f32 %v803, %v943
      %v960 = vadd.f32 %v805, %v944
      %v961 = vadd.f32 %v808, %v945
      %v962 = vadd.f32 %v810, %v946
      %v963 = vadd.f32 %v813, %v947
      %v964 = vadd.f32 %v815, %v948
      %v965 = vadd.f32 %v818, %v949
      %v966 = vadd.f32 %v820, %v950
      %v967 = vpack.c.bf16 %v952, %v951
      %v968 = vpack.c.bf16 %v954, %v953
      %v969 = vpack.c.bf16 %v956, %v955
      %v970 = vpack.c.bf16 %v958, %v957
      %v971 = vpack.c.bf16 %v960, %v959
      %v972 = vpack.c.bf16 %v962, %v961
      %v973 = vpack.c.bf16 %v964, %v963
      %v974 = vpack.c.bf16 %v966, %v965
      %v975 = vld [vmem:[%s6] sm:$0xf]
      %v976 = vld [vmem:[%s6 + $0x4] sm:$0xf]
      %v977 = vld [vmem:[%s6 + $0x8] sm:$0xf]
      %v978 = vld [vmem:[%s6 + $0xc] sm:$0xf]
      %v979 = vld [vmem:[%s6 + $0x10] sm:$0xf]
      %v980 = vld [vmem:[%s6 + $0x14] sm:$0xf]
      %v981 = vld [vmem:[%s6 + $0x18] sm:$0xf]
      %v982 = vld [vmem:[%s6 + $0x1c] sm:$0xf]
      %v983 = vld [vmem:[%s6 + $0x20] sm:$0xf]
      %v984 = vld [vmem:[%s6 + $0x24] sm:$0xf]
      %v985 = vld [vmem:[%s6 + $0x28] sm:$0xf]
      %v986 = vld [vmem:[%s6 + $0x2c] sm:$0xf]
      %v987 = vld [vmem:[%s6 + $0x30] sm:$0xf]
      %v988 = vld [vmem:[%s6 + $0x34] sm:$0xf]
      %v989 = vld [vmem:[%s6 + $0x38] sm:$0xf]
      %v990 = vld [vmem:[%s6 + $0x3c] sm:$0xf]
      %v991 = vld [vmem:[%s7] sm:$0x1]
      %v993 = vperm.slane %v991, 0
      %v1011 = vunpack.c.l.b16 %v975
      %v1012 = vunpack.c.l.b16 %v976
      %v1013 = vunpack.c.l.b16 %v977
      %v1014 = vunpack.c.l.b16 %v978
      %v1015 = vunpack.c.l.b16 %v979
      %v1016 = vunpack.c.l.b16 %v980
      %v1017 = vunpack.c.l.b16 %v981
      %v1018 = vunpack.c.l.b16 %v982
      %v1019 = vunpack.c.l.b16 %v983
      %v1020 = vunpack.c.l.b16 %v984
      %v1021 = vunpack.c.l.b16 %v985
      %v1022 = vunpack.c.l.b16 %v986
      %v1023 = vunpack.c.l.b16 %v987
      %v1024 = vunpack.c.l.b16 %v988
      %v1025 = vunpack.c.l.b16 %v989
      %v1026 = vunpack.c.l.b16 %v990
      %v1027 = vpack.c.b16 %v1012, %v1011
      %v1028 = vpack.c.b16 %v1014, %v1013
      %v1029 = vpack.c.b16 %v1016, %v1015
      %v1030 = vpack.c.b16 %v1018, %v1017
      %v1031 = vpack.c.b16 %v1020, %v1019
      %v1032 = vpack.c.b16 %v1022, %v1021
      %v1033 = vpack.c.b16 %v1024, %v1023
      %v1034 = vpack.c.b16 %v1026, %v1025
      %1043 = vmatpush.bf16.msra.mxu0 %v1034
      %1044 = vmatpush.bf16.msra.mxu0 %v1033
      %1045 = vmatpush.bf16.msra.mxu0 %v1032
      %1046 = vmatpush.bf16.msra.mxu0 %v1031
      %1047 = vmatpush.bf16.msra.mxu0 %v1030
      %1048 = vmatpush.bf16.msra.mxu0 %v1029
      %1049 = vmatpush.bf16.msra.mxu0 %v1028
      %1050 = vmatpush.bf16.msra.mxu0 %v1027
      %1051 = vmatmul.bf16.gmra.mxu0 %v967
      %v1052 = vpop.f32.mrf.mxu0
      %v1053 = vadd.f32 %v993, %v1052
      %v1054 = vpop.f32.mrf.mxu0
      %v1055 = vadd.f32 %v993, %v1054
      %1056 = vmatmul.bf16.gmra.mxu0 %v968
      %v1057 = vpop.f32.mrf.mxu0
      %v1058 = vadd.f32 %v993, %v1057
      %v1059 = vpop.f32.mrf.mxu0
      %v1060 = vadd.f32 %v993, %v1059
      %1061 = vmatmul.bf16.gmra.mxu0 %v969
      %v1062 = vpop.f32.mrf.mxu0
      %v1063 = vadd.f32 %v993, %v1062
      %v1064 = vpop.f32.mrf.mxu0
      %v1065 = vadd.f32 %v993, %v1064
      %1066 = vmatmul.bf16.gmra.mxu0 %v970
      %v1067 = vpop.f32.mrf.mxu0
      %v1068 = vadd.f32 %v993, %v1067
      %v1069 = vpop.f32.mrf.mxu0
      %v1070 = vadd.f32 %v993, %v1069
      %1071 = vmatmul.bf16.gmra.mxu0 %v971
      %v1072 = vpop.f32.mrf.mxu0
      %v1073 = vadd.f32 %v993, %v1072
      %v1074 = vpop.f32.mrf.mxu0
      %v1075 = vadd.f32 %v993, %v1074
      %1076 = vmatmul.bf16.gmra.mxu0 %v972
      %v1077 = vpop.f32.mrf.mxu0
      %v1078 = vadd.f32 %v993, %v1077
      %v1079 = vpop.f32.mrf.mxu0
      %v1080 = vadd.f32 %v993, %v1079
      %1081 = vmatmul.bf16.gmra.mxu0 %v973
      %v1082 = vpop.f32.mrf.mxu0
      %v1083 = vadd.f32 %v993, %v1082
      %v1084 = vpop.f32.mrf.mxu0
      %v1085 = vadd.f32 %v993, %v1084
      %1086 = vmatmul.bf16.gmra.mxu0 %v974
      %v1087 = vpop.f32.mrf.mxu0
      %v1088 = vadd.f32 %v993, %v1087
      %v1089 = vpop.f32.mrf.mxu0
      %v1090 = vadd.f32 %v993, %v1089
      %1091 = vdwg.mxu0
      %v1092 = vmax.f32 %v1053, 0.0
      %v1093 = vmax.f32 %v1055, 0.0
      %v1094 = vmax.f32 %v1058, 0.0
      %v1095 = vmax.f32 %v1060, 0.0
      %v1096 = vmax.f32 %v1063, 0.0
      %v1097 = vmax.f32 %v1065, 0.0
      %v1098 = vmax.f32 %v1068, 0.0
      %v1099 = vmax.f32 %v1070, 0.0
      %v1100 = vmax.f32 %v1073, 0.0
      %v1101 = vmax.f32 %v1075, 0.0
      %v1102 = vmax.f32 %v1078, 0.0
      %v1103 = vmax.f32 %v1080, 0.0
      %v1104 = vmax.f32 %v1083, 0.0
      %v1105 = vmax.f32 %v1085, 0.0
      %v1106 = vmax.f32 %v1088, 0.0
      %v1107 = vmax.f32 %v1090, 0.0
      %v1108 = vpack.c.bf16 %v1093, %v1092
      %v1109 = vpack.c.bf16 %v1095, %v1094
      %v1110 = vpack.c.bf16 %v1097, %v1096
      %v1111 = vpack.c.bf16 %v1099, %v1098
      %v1112 = vpack.c.bf16 %v1101, %v1100
      %v1113 = vpack.c.bf16 %v1103, %v1102
      %v1114 = vpack.c.bf16 %v1105, %v1104
      %v1115 = vpack.c.bf16 %v1107, %v1106
      %v1116 = vld [vmem:[%s8] sm:$0xf]
      %v1117 = vld [vmem:[%s8 + $0x4] sm:$0xf]
      %v1118 = vld [vmem:[%s8 + $0x8] sm:$0xf]
      %v1119 = vld [vmem:[%s8 + $0xc] sm:$0xf]
      %v1120 = vld [vmem:[%s8 + $0x10] sm:$0xf]
      %v1121 = vld [vmem:[%s8 + $0x14] sm:$0xf]
      %v1122 = vld [vmem:[%s8 + $0x18] sm:$0xf]
      %v1123 = vld [vmem:[%s8 + $0x1c] sm:$0xf]
      %v1124 = vld [vmem:[%s8 + $0x20] sm:$0xf]
      %v1125 = vld [vmem:[%s8 + $0x24] sm:$0xf]
      %v1126 = vld [vmem:[%s8 + $0x28] sm:$0xf]
      %v1127 = vld [vmem:[%s8 + $0x2c] sm:$0xf]
      %v1128 = vld [vmem:[%s8 + $0x30] sm:$0xf]
      %v1129 = vld [vmem:[%s8 + $0x34] sm:$0xf]
      %v1130 = vld [vmem:[%s8 + $0x38] sm:$0xf]
      %v1131 = vld [vmem:[%s8 + $0x3c] sm:$0xf]
      %v1132 = vld [vmem:[%s9] sm:$0x1]
      %v1134 = vperm.slane %v1132, 0
      %v1152 = vunpack.c.l.b16 %v1116
      %v1153 = vunpack.c.l.b16 %v1117
      %v1154 = vunpack.c.l.b16 %v1118
      %v1155 = vunpack.c.l.b16 %v1119
      %v1156 = vunpack.c.l.b16 %v1120
      %v1157 = vunpack.c.l.b16 %v1121
      %v1158 = vunpack.c.l.b16 %v1122
      %v1159 = vunpack.c.l.b16 %v1123
      %v1160 = vunpack.c.l.b16 %v1124
      %v1161 = vunpack.c.l.b16 %v1125
      %v1162 = vunpack.c.l.b16 %v1126
      %v1163 = vunpack.c.l.b16 %v1127
      %v1164 = vunpack.c.l.b16 %v1128
      %v1165 = vunpack.c.l.b16 %v1129
      %v1166 = vunpack.c.l.b16 %v1130
      %v1167 = vunpack.c.l.b16 %v1131
      %v1168 = vpack.c.b16 %v1153, %v1152
      %v1169 = vpack.c.b16 %v1155, %v1154
      %v1170 = vpack.c.b16 %v1157, %v1156
      %v1171 = vpack.c.b16 %v1159, %v1158
      %v1172 = vpack.c.b16 %v1161, %v1160
      %v1173 = vpack.c.b16 %v1163, %v1162
      %v1174 = vpack.c.b16 %v1165, %v1164
      %v1175 = vpack.c.b16 %v1167, %v1166
      %1184 = vmatpush.bf16.msra.mxu0 %v1175
      %1185 = vmatpush.bf16.msra.mxu0 %v1174
      %1186 = vmatpush.bf16.msra.mxu0 %v1173
      %1187 = vmatpush.bf16.msra.mxu0 %v1172
      %1188 = vmatpush.bf16.msra.mxu0 %v1171
      %1189 = vmatpush.bf16.msra.mxu0 %v1170
      %1190 = vmatpush.bf16.msra.mxu0 %v1169
      %1191 = vmatpush.bf16.msra.mxu0 %v1168
      %1192 = vmatmul.bf16.gmra.mxu0 %v1108
      %v1193 = vpop.f32.mrf.mxu0
      %v1194 = vadd.f32 %v1134, %v1193
      %v1195 = vpop.f32.mrf.mxu0
      %v1196 = vadd.f32 %v1134, %v1195
      %1197 = vmatmul.bf16.gmra.mxu0 %v1109
      %v1198 = vpop.f32.mrf.mxu0
      %v1199 = vadd.f32 %v1134, %v1198
      %v1200 = vpop.f32.mrf.mxu0
      %v1201 = vadd.f32 %v1134, %v1200
      %1202 = vmatmul.bf16.gmra.mxu0 %v1110
      %v1203 = vpop.f32.mrf.mxu0
      %v1204 = vadd.f32 %v1134, %v1203
      %v1205 = vpop.f32.mrf.mxu0
      %v1206 = vadd.f32 %v1134, %v1205
      %1207 = vmatmul.bf16.gmra.mxu0 %v1111
      %v1208 = vpop.f32.mrf.mxu0
      %v1209 = vadd.f32 %v1134, %v1208
      %v1210 = vpop.f32.mrf.mxu0
      %v1211 = vadd.f32 %v1134, %v1210
      %1212 = vmatmul.bf16.gmra.mxu0 %v1112
      %v1213 = vpop.f32.mrf.mxu0
      %v1214 = vadd.f32 %v1134, %v1213
      %v1215 = vpop.f32.mrf.mxu0
      %v1216 = vadd.f32 %v1134, %v1215
      %1217 = vmatmul.bf16.gmra.mxu0 %v1113
      %v1218 = vpop.f32.mrf.mxu0
      %v1219 = vadd.f32 %v1134, %v1218
      %v1220 = vpop.f32.mrf.mxu0
      %v1221 = vadd.f32 %v1134, %v1220
      %1222 = vmatmul.bf16.gmra.mxu0 %v1114
      %v1223 = vpop.f32.mrf.mxu0
      %v1224 = vadd.f32 %v1134, %v1223
      %v1225 = vpop.f32.mrf.mxu0
      %v1226 = vadd.f32 %v1134, %v1225
      %1227 = vmatmul.bf16.gmra.mxu0 %v1115
      %v1228 = vpop.f32.mrf.mxu0
      %v1229 = vadd.f32 %v1134, %v1228
      %v1230 = vpop.f32.mrf.mxu0
      %v1231 = vadd.f32 %v1134, %v1230
      %1232 = vdwg.mxu0
      %1233 = vst [vmem:[%s452] sm:$0xff] %v1194
      %1234 = vst [vmem:[%s452 + $0x8] sm:$0xff] %v1196
      %1235 = vst [vmem:[%s452 + $0x10] sm:$0xff] %v1199
      %1236 = vst [vmem:[%s452 + $0x18] sm:$0xff] %v1201
      %1237 = vst [vmem:[%s452 + $0x20] sm:$0xff] %v1204
      %1238 = vst [vmem:[%s452 + $0x28] sm:$0xff] %v1206
      %1239 = vst [vmem:[%s452 + $0x30] sm:$0xff] %v1209
      %1240 = vst [vmem:[%s452 + $0x38] sm:$0xff] %v1211
      %1241 = vst [vmem:[%s452 + $0x40] sm:$0xff] %v1214
      %1242 = vst [vmem:[%s452 + $0x48] sm:$0xff] %v1216
      %1243 = vst [vmem:[%s452 + $0x50] sm:$0xff] %v1219
      %1244 = vst [vmem:[%s452 + $0x58] sm:$0xff] %v1221
      %1245 = vst [vmem:[%s452 + $0x60] sm:$0xff] %v1224
      %1246 = vst [vmem:[%s452 + $0x68] sm:$0xff] %v1226
      %1247 = vst [vmem:[%s452 + $0x70] sm:$0xff] %v1229
      %1248 = vst [vmem:[%s452 + $0x78] sm:$0xff] %v1231
      %1249 = vst [vmem:[%s458] sm:$0xff] %v783
      %1250 = vst [vmem:[%s458 + $0x8] sm:$0xff] %v785
      %1251 = vst [vmem:[%s458 + $0x10] sm:$0xff] %v788
      %1252 = vst [vmem:[%s458 + $0x18] sm:$0xff] %v790
      %1253 = vst [vmem:[%s458 + $0x20] sm:$0xff] %v793
      %1254 = vst [vmem:[%s458 + $0x28] sm:$0xff] %v795
      %1255 = vst [vmem:[%s458 + $0x30] sm:$0xff] %v798
      %1256 = vst [vmem:[%s458 + $0x38] sm:$0xff] %v800
      %1257 = vst [vmem:[%s458 + $0x40] sm:$0xff] %v803
      %1258 = vst [vmem:[%s458 + $0x48] sm:$0xff] %v805
      %1259 = vst [vmem:[%s458 + $0x50] sm:$0xff] %v808
      %1260 = vst [vmem:[%s458 + $0x58] sm:$0xff] %v810
      %1261 = vst [vmem:[%s458 + $0x60] sm:$0xff] %v813
      %1262 = vst [vmem:[%s458 + $0x68] sm:$0xff] %v815
      %1263 = vst [vmem:[%s458 + $0x70] sm:$0xff] %v818
      %1264 = vst [vmem:[%s458 + $0x78] sm:$0xff] %v820
      %1265 = vst [vmem:[%s464] sm:$0xff] %v872
      %1266 = vst [vmem:[%s464 + $0x8] sm:$0xff] %v874
      %1267 = vst [vmem:[%s464 + $0x10] sm:$0xff] %v876
      %1268 = vst [vmem:[%s464 + $0x18] sm:$0xff] %v878
      %1269 = vst [vmem:[%s464 + $0x20] sm:$0xff] %v880
      %1270 = vst [vmem:[%s464 + $0x28] sm:$0xff] %v882
      %1271 = vst [vmem:[%s464 + $0x30] sm:$0xff] %v884
      %1272 = vst [vmem:[%s464 + $0x38] sm:$0xff] %v886
      %1273 = vst [vmem:[%s464 + $0x40] sm:$0xff] %v888
      %1274 = vst [vmem:[%s464 + $0x48] sm:$0xff] %v890
      %1275 = vst [vmem:[%s464 + $0x50] sm:$0xff] %v892
      %1276 = vst [vmem:[%s464 + $0x58] sm:$0xff] %v894
      %1277 = vst [vmem:[%s464 + $0x60] sm:$0xff] %v896
      %1278 = vst [vmem:[%s464 + $0x68] sm:$0xff] %v898
      %1279 = vst [vmem:[%s464 + $0x70] sm:$0xff] %v900
      %1280 = vst [vmem:[%s464 + $0x78] sm:$0xff] %v902
      %s1281 = smul.u32 16, %s24
      %p1282 = scmp.lt.s32.totalorder %s1281, 63
      %s1283 = scalar_select %p1282, %s1281, 63
      %s1284 = smul.addr %s1283, 8
      %s1285 = scalar_lea.vmem %s10, %s1284
      %s1286 = smul.u32 16, %s24
      %p1287 = scmp.lt.s32.totalorder %s1286, 63
      %s1288 = scalar_select %p1287, %s1286, 63
      %s1289 = smul.addr %s1288, 8
      %s1290 = scalar_lea.vmem %s11, %s1289
      %s1291 = smul.u32 16, %s24
      %p1292 = scmp.lt.s32.totalorder %s1291, 63
      %s1293 = scalar_select %p1292, %s1291, 63
      %s1294 = smul.addr %s1293, 8
      %s1295 = scalar_lea.vmem %s12, %s1294
      // Predicated region
      $region61: #{vae_forward.1} parent=59 // pred_check
        %p1296 = pneg %p262
      $region62: #{vae_forward.1} parent=59 // pred_check_branch
        %1298 = sbr.rel (%p1296) target = $region64
      $region63: #{vae_forward.1} parent=59 // pred_region
        %s1299 = smul.u32 16, %s24
      $region64: #{vae_forward.1} parent=59 // pred_fallthru
        _
      // Predicated region
      $region65: #{vae_forward.1} parent=59 // pred_check
        %p1300 = pneg %p288
      $region66: #{vae_forward.1} parent=59 // pred_check_branch
        %1302 = sbr.rel (%p1300) target = $region68
      $region67: #{vae_forward.1} parent=59 // pred_region
        %s1303 = smul.u32 16, %s24
      $region68: #{vae_forward.1} parent=59 // pred_fallthru
        _
      // Predicated region
      $region69: #{vae_forward.1} parent=59 // pred_check
        %p1304 = pneg %p314
      $region70: #{vae_forward.1} parent=59 // pred_check_branch
        %1306 = sbr.rel (%p1304) target = $region72
      $region71: #{vae_forward.1} parent=59 // pred_region
        %s1307 = smul.u32 16, %s24
      $region72: #{vae_forward.1} parent=59 // pred_fallthru
        _
    $region60: #{vae_forward.1} parent=5 // pred_fallthru
      _
    %p1308 = scmp.le.s32.totalorder 2, %s19
    // Predicated region
    $region73: #{vae_forward.1} parent=5 // pred_check
      %p1309 = pneg %p1308
    $region74: #{vae_forward.1} parent=5 // pred_check_branch
      %1311 = sbr.rel (%p1309) target = $region76
    $region75: #{vae_forward.1} parent=5 // pred_region
      %s1312 = ssub.s32 %s19, 2
      // Predicated region
      $region77: #{vae_forward.1} parent=75 // pred_check
        %p1313 = pneg %p268
      $region78: #{vae_forward.1} parent=75 // pred_check_branch
        %1315 = sbr.rel (%p1313) target = $region80
      $region79: #{vae_forward.1} parent=75 // pred_region
        %s1316 = smul.u32 16, %s25
        %p1317 = scmp.lt.s32.totalorder %s1316, 63
        %s1318 = scalar_select %p1317, %s1316, 63
        %s1319 = smul.addr %s1318, 8
        %s1320 = scalar_lea.vmem %s10, %s1319
      $region80: #{vae_forward.1} parent=75 // pred_fallthru
        _
      // Predicated region
      $region81: #{vae_forward.1} parent=75 // pred_check
        %p1321 = pneg %p294
      $region82: #{vae_forward.1} parent=75 // pred_check_branch
        %1323 = sbr.rel (%p1321) target = $region84
      $region83: #{vae_forward.1} parent=75 // pred_region
        %s1324 = smul.u32 16, %s25
        %p1325 = scmp.lt.s32.totalorder %s1324, 63
        %s1326 = scalar_select %p1325, %s1324, 63
        %s1327 = smul.addr %s1326, 8
        %s1328 = scalar_lea.vmem %s11, %s1327
      $region84: #{vae_forward.1} parent=75 // pred_fallthru
        _
      // Predicated region
      $region85: #{vae_forward.1} parent=75 // pred_check
        %p1329 = pneg %p320
      $region86: #{vae_forward.1} parent=75 // pred_check_branch
        %1331 = sbr.rel (%p1329) target = $region88
      $region87: #{vae_forward.1} parent=75 // pred_region
        %s1332 = smul.u32 16, %s25
        %p1333 = scmp.lt.s32.totalorder %s1332, 63
        %s1334 = scalar_select %p1333, %s1332, 63
        %s1335 = smul.addr %s1334, 8
        %s1336 = scalar_lea.vmem %s12, %s1335
      $region88: #{vae_forward.1} parent=75 // pred_fallthru
        _
    $region76: #{vae_forward.1} parent=5 // pred_fallthru
      _
  $region6: #{vae_forward.1} parent=0 // loop_footer
    %s23 = sadd.s32 1, %s19
  $region7: #{vae_forward.1} parent=0 // loop_footer_branch
    %18 = sbr.rel target = $region3
  $region8: #{vae_forward.1} parent=0 // loop_exit
    _

</llo_original>
